<compile_context>
chip_gen: v6e
topology: v6e:2x2x1
jax: 0.10.0
libtpu: 0.0.40
codegen_flags: <defaults>
</compile_context>

<pallas_src>
import jax
import jax.numpy as jnp
from jax.experimental import pallas as pl
from jax.experimental.pallas import tpu as pltpu

INPUT_DIM = 12
H1 = 256
H2 = 128
OUTPUT_DIM = 2


def _mlp_kernel(x_ref, w1_ref, s1_ref, w2_ref, b2_ref, w3_ref, b3_ref, o_ref):
    # x_ref: (TB, 12) bf16; weights bf16; shift/biases f32.
    x = x_ref[...]

    # Linear(12 -> 256) with BN + b1 folded in, then ReLU.
    h1 = jnp.dot(x, w1_ref[...], preferred_element_type=jnp.float32) + s1_ref[...]
    h1 = jnp.maximum(h1, 0.0)
    # Dropout(0.3) -> identity in eval mode.

    # Linear(256 -> 128) + ReLU.
    h2 = jnp.dot(h1.astype(jnp.bfloat16), w2_ref[...],
                 preferred_element_type=jnp.float32) + b2_ref[...]
    h2 = jnp.maximum(h2, 0.0)

    # Linear(128 -> 2).
    out = jnp.dot(h2.astype(jnp.bfloat16), w3_ref[...],
                  preferred_element_type=jnp.float32) + b3_ref[...]
    o_ref[...] = out.astype(o_ref.dtype)


def _round_up(a, m):
    return ((a + m - 1) // m) * m


def binary_classification_forward(x, params, *, tb_max=1024):
    """x: (B, 12) float32. Returns (B, 2) float32 logits (eval-mode forward)."""
    B = x.shape[0]
    (w1, b1, gamma, beta, run_mean, run_var, w2, b2, w3, b3) = params

    # --- fold BatchNorm (eval mode) + b1 into the first layer (plain-JAX glue) ---
    eps = 1e-5
    bn_scale = gamma / jnp.sqrt(run_var + eps)          # (256,)
    bn_shift = beta - run_mean * bn_scale               # (256,)
    w1_folded = (w1 * bn_scale[None, :]).astype(jnp.bfloat16)   # (12, 256)
    shift1 = (b1 * bn_scale + bn_shift).astype(jnp.float32)     # (256,)

    w2_bf = w2.astype(jnp.bfloat16)
    w3_bf = w3.astype(jnp.bfloat16)

    def row(v):  # 1-D params as (1, N), lane-major broadcast, f32
        return v.reshape(1, -1).astype(jnp.float32)

    # --- batch tiling: pad B to a multiple of TB (TB multiple of 8, capped for VMEM) ---
    TB = min(tb_max, _round_up(B, 8))
    B_pad = _round_up(B, TB)
    x_bf = x.astype(jnp.bfloat16)
    if B_pad != B:
        x_bf = jnp.pad(x_bf, ((0, B_pad - B), (0, 0)))

    grid = (B_pad // TB,)
    const2 = lambda i: (0, 0)   # weights/biases: same block every step -> stay resident

    flops = 2 * B_pad * (INPUT_DIM * H1 + H1 * H2 + H2 * OUTPUT_DIM)
    bytes_accessed = (B_pad * (INPUT_DIM * 2 + OUTPUT_DIM * 4)
                      + (INPUT_DIM * H1 + H1 * H2 + H2 * OUTPUT_DIM) * 2
                      + (H1 + H2 + OUTPUT_DIM) * 4)

    out = pl.pallas_call(
        _mlp_kernel,
        out_shape=jax.ShapeDtypeStruct((B_pad, OUTPUT_DIM), jnp.float32),
        grid=grid,
        in_specs=[
            pl.BlockSpec((TB, INPUT_DIM), lambda i: (i, 0)),   # x tile (moves with i)
            pl.BlockSpec((INPUT_DIM, H1), const2),             # w1 (folded)
            pl.BlockSpec((1, H1), const2),                     # shift1 (BN + b1)
            pl.BlockSpec((H1, H2), const2),                    # w2
            pl.BlockSpec((1, H2), const2),                     # b2
            pl.BlockSpec((H2, OUTPUT_DIM), const2),            # w3
            pl.BlockSpec((1, OUTPUT_DIM), const2),             # b3
        ],
        out_specs=pl.BlockSpec((TB, OUTPUT_DIM), lambda i: (i, 0)),
        compiler_params=pltpu.CompilerParams(
            dimension_semantics=("parallel",),   # megacore on v7x, no-op on v5e/v6e
            vmem_limit_bytes=32 << 20,
        ),
        cost_estimate=pl.CostEstimate(flops=flops, transcendentals=0,
                                      bytes_accessed=bytes_accessed),
    )(x_bf, w1_folded, row(shift1), w2_bf, row(b2), w3_bf, row(b3))

    return out[:B]


def init_params(key):
    """Deterministic init matching PyTorch defaults:
    Linear: U(-1/sqrt(fan_in), 1/sqrt(fan_in)); BN: gamma=1, beta=0, mean=0, var=1.
    Weights stored as (in_features, out_features)."""
    ks = jax.random.split(key, 6)

    def linear(kw, kb, fan_in, fan_out):
        bound = 1.0 / jnp.sqrt(fan_in)
        w = jax.random.uniform(kw, (fan_in, fan_out), jnp.float32, -bound, bound)
        b = jax.random.uniform(kb, (fan_out,), jnp.float32, -bound, bound)
        return w, b

    w1, b1 = linear(ks[0], ks[1], INPUT_DIM, H1)
    w2, b2 = linear(ks[2], ks[3], H1, H2)
    w3, b3 = linear(ks[4], ks[5], H2, OUTPUT_DIM)

    gamma = jnp.ones((H1,), jnp.float32)
    beta = jnp.zeros((H1,), jnp.float32)
    run_mean = jnp.zeros((H1,), jnp.float32)
    run_var = jnp.ones((H1,), jnp.float32)

    return (w1, b1, gamma, beta, run_mean, run_var, w2, b2, w3, b3)


if __name__ == "__main__":
    key = jax.random.PRNGKey(0)
    k_params, k_x = jax.random.split(key)

    params = init_params(k_params)
    B = 8
    x = jax.random.normal(k_x, (B, INPUT_DIM), jnp.float32)

    logits = binary_classification_forward(x, params)
    jax.block_until_ready(logits)

    # sanity check against a pure-JAX f32 reference (bf16 MXU inputs -> loose tolerance)
    w1, b1, gamma, beta, rm, rv, w2, b2, w3, b3 = params
    eps = 1e-5
    h1 = x @ w1 + b1
    h1 = (h1 - rm) / jnp.sqrt(rv + eps) * gamma + beta
    h1 = jnp.maximum(h1, 0.0)
    h2 = jnp.maximum(h1 @ w2 + b2, 0.0)
    ref = h2 @ w3 + b3

    assert logits.shape == (B, OUTPUT_DIM)
    assert jnp.allclose(logits, ref, atol=3e-2, rtol=3e-2), (
        f"max abs diff {jnp.max(jnp.abs(logits - ref))}")

    print("KERNEL_OK")
</pallas_src>

<mosaic_0001>
module attributes {stable_mosaic.version = 11 : i64} {
  func.func @_mlp_kernel(%arg0: i32, %arg1: memref<8x12xbf16, #tpu.memory_space<vmem>>, %arg2: memref<12x256xbf16, #tpu.memory_space<vmem>>, %arg3: memref<1x256xf32, #tpu.memory_space<vmem>>, %arg4: memref<256x128xbf16, #tpu.memory_space<vmem>>, %arg5: memref<1x128xf32, #tpu.memory_space<vmem>>, %arg6: memref<128x2xbf16, #tpu.memory_space<vmem>>, %arg7: memref<1x2xf32, #tpu.memory_space<vmem>>, %arg8: memref<8x2xf32, #tpu.memory_space<vmem>>) attributes {dimension_semantics = [#tpu.dimension_semantics<parallel>], iteration_bounds = array<i64: 1>, scalar_prefetch = 0 : i64, scratch_operands = 0 : i64, tpu.core_type = #tpu.core_type<tc>, window_params = [{transform_indices = @transform_0, window_bounds = array<i64: 8, 12>}, {pipeline_mode = #tpu.pipeline_mode<synchronous>, transform_indices = @transform_1, window_bounds = array<i64: 12, 256>}, {pipeline_mode = #tpu.pipeline_mode<synchronous>, transform_indices = @transform_2, window_bounds = array<i64: 1, 256>}, {pipeline_mode = #tpu.pipeline_mode<synchronous>, transform_indices = @transform_3, window_bounds = array<i64: 256, 128>}, {pipeline_mode = #tpu.pipeline_mode<synchronous>, transform_indices = @transform_4, window_bounds = array<i64: 1, 128>}, {pipeline_mode = #tpu.pipeline_mode<synchronous>, transform_indices = @transform_5, window_bounds = array<i64: 128, 2>}, {pipeline_mode = #tpu.pipeline_mode<synchronous>, transform_indices = @transform_6, window_bounds = array<i64: 1, 2>}, {transform_indices = @transform_7, window_bounds = array<i64: 8, 2>}]} {
    %c0 = arith.constant 0 : index
    %c0_0 = arith.constant 0 : index
    %0 = vector.load %arg1[%c0, %c0_0] : memref<8x12xbf16, #tpu.memory_space<vmem>>, vector<8x12xbf16>
    %c0_1 = arith.constant 0 : index
    %c0_2 = arith.constant 0 : index
    %1 = vector.load %arg2[%c0_1, %c0_2] : memref<12x256xbf16, #tpu.memory_space<vmem>>, vector<12x256xbf16>
    %cst = arith.constant dense<0.000000e+00> : vector<8x256xf32>
    %2 = tpu.matmul %0, %1, %cst {dimension_numbers = #tpu.dot_dimension_numbers<[1], [0], [0], [1], [0, 0, 1, 1], [], []>} : vector<8x12xbf16>, vector<12x256xbf16>, vector<8x256xf32> -> vector<8x256xf32>
    %c0_3 = arith.constant 0 : index
    %c0_4 = arith.constant 0 : index
    %3 = vector.load %arg3[%c0_3, %c0_4] : memref<1x256xf32, #tpu.memory_space<vmem>>, vector<1x256xf32>
    %4 = vector.broadcast %3 : vector<1x256xf32> to vector<8x256xf32>
    %5 = arith.addf %2, %4 : vector<8x256xf32>
    %cst_5 = arith.constant 0.000000e+00 : f32
    %6 = vector.broadcast %cst_5 : f32 to vector<8x256xf32>
    %7 = arith.maximumf %5, %6 : vector<8x256xf32>
    %8 = arith.truncf %7 : vector<8x256xf32> to vector<8x256xbf16>
    %c0_6 = arith.constant 0 : index
    %c0_7 = arith.constant 0 : index
    %9 = vector.load %arg4[%c0_6, %c0_7] : memref<256x128xbf16, #tpu.memory_space<vmem>>, vector<256x128xbf16>
    %cst_8 = arith.constant dense<0.000000e+00> : vector<8x128xf32>
    %10 = tpu.matmul %8, %9, %cst_8 {dimension_numbers = #tpu.dot_dimension_numbers<[1], [0], [0], [1], [0, 0, 1, 1], [], []>} : vector<8x256xbf16>, vector<256x128xbf16>, vector<8x128xf32> -> vector<8x128xf32>
    %c0_9 = arith.constant 0 : index
    %c0_10 = arith.constant 0 : index
    %11 = vector.load %arg5[%c0_9, %c0_10] : memref<1x128xf32, #tpu.memory_space<vmem>>, vector<1x128xf32>
    %12 = vector.broadcast %11 : vector<1x128xf32> to vector<8x128xf32>
    %13 = arith.addf %10, %12 : vector<8x128xf32>
    %cst_11 = arith.constant 0.000000e+00 : f32
    %14 = vector.broadcast %cst_11 : f32 to vector<8x128xf32>
    %15 = arith.maximumf %13, %14 : vector<8x128xf32>
    %16 = arith.truncf %15 : vector<8x128xf32> to vector<8x128xbf16>
    %c0_12 = arith.constant 0 : index
    %c0_13 = arith.constant 0 : index
    %17 = vector.load %arg6[%c0_12, %c0_13] : memref<128x2xbf16, #tpu.memory_space<vmem>>, vector<128x2xbf16>
    %cst_14 = arith.constant dense<0.000000e+00> : vector<8x2xf32>
    %18 = tpu.matmul %16, %17, %cst_14 {dimension_numbers = #tpu.dot_dimension_numbers<[1], [0], [0], [1], [0, 0, 1, 1], [], []>} : vector<8x128xbf16>, vector<128x2xbf16>, vector<8x2xf32> -> vector<8x2xf32>
    %c0_15 = arith.constant 0 : index
    %c0_16 = arith.constant 0 : index
    %19 = vector.load %arg7[%c0_15, %c0_16] : memref<1x2xf32, #tpu.memory_space<vmem>>, vector<1x2xf32>
    %20 = vector.broadcast %19 : vector<1x2xf32> to vector<8x2xf32>
    %21 = arith.addf %18, %20 : vector<8x2xf32>
    %c0_17 = arith.constant 0 : index
    %c0_18 = arith.constant 0 : index
    %22 = vector.load %arg8[%c0_17, %c0_18] : memref<8x2xf32, #tpu.memory_space<vmem>>, vector<8x2xf32>
    tpu.vector_store %arg8[%c0_17, %c0_18], %21 {strides = array<i32>} : memref<8x2xf32, #tpu.memory_space<vmem>>, vector<8x2xf32>,
    return
  }
  func.func @transform_0(%arg0: i32) -> (i32, i32) {
    %c0_i32 = arith.constant 0 : i32
    %c0_i32_0 = arith.constant 0 : i32
    return %arg0, %c0_i32 : i32, i32
  }
  func.func @transform_1(%arg0: i32) -> (i32, i32) {
    %c0_i32 = arith.constant 0 : i32
    %c0_i32_0 = arith.constant 0 : i32
    %c0_i32_1 = arith.constant 0 : i32
    return %c0_i32, %c0_i32_0 : i32, i32
  }
  func.func @transform_2(%arg0: i32) -> (i32, i32) {
    %c0_i32 = arith.constant 0 : i32
    %c0_i32_0 = arith.constant 0 : i32
    %c0_i32_1 = arith.constant 0 : i32
    return %c0_i32, %c0_i32_0 : i32, i32
  }
  func.func @transform_3(%arg0: i32) -> (i32, i32) {
    %c0_i32 = arith.constant 0 : i32
    %c0_i32_0 = arith.constant 0 : i32
    %c0_i32_1 = arith.constant 0 : i32
    return %c0_i32, %c0_i32_0 : i32, i32
  }
  func.func @transform_4(%arg0: i32) -> (i32, i32) {
    %c0_i32 = arith.constant 0 : i32
    %c0_i32_0 = arith.constant 0 : i32
    %c0_i32_1 = arith.constant 0 : i32
    return %c0_i32, %c0_i32_0 : i32, i32
  }
  func.func @transform_5(%arg0: i32) -> (i32, i32) {
    %c0_i32 = arith.constant 0 : i32
    %c0_i32_0 = arith.constant 0 : i32
    %c0_i32_1 = arith.constant 0 : i32
    return %c0_i32, %c0_i32_0 : i32, i32
  }
  func.func @transform_6(%arg0: i32) -> (i32, i32) {
    %c0_i32 = arith.constant 0 : i32
    %c0_i32_0 = arith.constant 0 : i32
    %c0_i32_1 = arith.constant 0 : i32
    return %c0_i32, %c0_i32_0 : i32, i32
  }
  func.func @transform_7(%arg0: i32) -> (i32, i32) {
    %c0_i32 = arith.constant 0 : i32
    %c0_i32_0 = arith.constant 0 : i32
    return %arg0, %c0_i32 : i32, i32
  }
}

</mosaic_0001>

<llo_original>
// kernel: tpu_custom_call.1
$region0: #{tpu_custom_call.1}
  #allocation0 [shape = 'u32[]', space=smem, size = 0x4, offset = 0x4, fixed_abs, tag = 'smem constant byte address 0x4 - core index']
  #allocation1 [shape = 'u32[144,128]{1,0:T(1,128)}', space=vmem, size = 0x12000, scoped, tag = 'internal scratch']
  %s0 = inlined_call_operand.vmem [shape: bf16[8,12], index: 0, kind: input, shape index: {}]
  %s1 = inlined_call_operand.vmem [shape: bf16[12,256], index: 1, kind: input, shape index: {}]
  %s2 = inlined_call_operand.vmem [shape: f32[1,256], index: 2, kind: input, shape index: {}]
  %s3 = inlined_call_operand.hbm [shape: bf16[256,128], index: 3, kind: input, shape index: {}]
  %s4 = inlined_call_operand.vmem [shape: f32[1,128], index: 4, kind: input, shape index: {}]
  %s5 = inlined_call_operand.vmem [shape: bf16[128,2], index: 5, kind: input, shape index: {}]
  %s6 = inlined_call_operand.vmem [shape: f32[1,2], index: 6, kind: input, shape index: {}]
  %s7 = inlined_call_operand.vmem [shape: f32[8,2], index: 7, kind: output, shape index: {}]
  %s8 = sld [smem:[#allocation0]]
  $region42: #{tpu_custom_call.1} parent=0
    _
  %s10 = ssub.s32 1, %s8
  %s11 = scalar_select 0, %s10, %s8
  $region1: #{tpu_custom_call.1} parent=0
    #allocation2 [shape = 'u8[65536]{0}', space=vmem, size = 0x10000, scoped, tag = 'input window, operand 3, single buffered']
    #allocation3 [shape = 's32[1]{0}', space=sflag, size = 0x4, scoped, tag = 'scoped memory for tpu_custom_call.1']
    %12 = vsyncpa [#allocation3], 0
    // Predicated region
    $region2: #{tpu_custom_call.1} parent=1 // pred_check
      _
    $region3: #{tpu_custom_call.1} parent=1 // pred_check_branch
      %14 = sbr.rel (0) target = $region5
    $region4: #{tpu_custom_call.1} parent=1 // pred_region
      _
    $region5: #{tpu_custom_call.1} parent=1 // pred_fallthru
      _
    // Predicated region
    $region6: #{tpu_custom_call.1} parent=1 // pred_check
      _
    $region7: #{tpu_custom_call.1} parent=1 // pred_check_branch
      %16 = sbr.rel (0) target = $region9
    $region8: #{tpu_custom_call.1} parent=1 // pred_region
      _
    $region9: #{tpu_custom_call.1} parent=1 // pred_fallthru
      _
    // Predicated region
    $region10: #{tpu_custom_call.1} parent=1 // pred_check
      _
    $region11: #{tpu_custom_call.1} parent=1 // pred_check_branch
      %18 = sbr.rel (0) target = $region13
    $region12: #{tpu_custom_call.1} parent=1 // pred_region
      _
    $region13: #{tpu_custom_call.1} parent=1 // pred_fallthru
      _
    // Predicated region
    $region14: #{tpu_custom_call.1} parent=1 // pred_check
      _
    $region15: #{tpu_custom_call.1} parent=1 // pred_check_branch
      %20 = sbr.rel (0) target = $region17
    $region16: #{tpu_custom_call.1} parent=1 // pred_region
      %s22 = ssub.s32 2048, 2048
      %23 = vsyncadd [#allocation3], %s22
      %s24 = sshll.u32 [#allocation2], 4
      %s25 = int_to_ptr.vmem [resolvable:$true] %s24
      %30 = dma.hbm_to_vmem [thread:$0]  %s3, 2048, %s25, [#allocation3], 64, 64, 4
    $region17: #{tpu_custom_call.1} parent=1 // pred_fallthru
      _
    // Predicated region
    $region18: #{tpu_custom_call.1} parent=1 // pred_check
      _
    $region19: #{tpu_custom_call.1} parent=1 // pred_check_branch
      %32 = sbr.rel (0) target = $region21
    $region20: #{tpu_custom_call.1} parent=1 // pred_region
      _
    $region21: #{tpu_custom_call.1} parent=1 // pred_fallthru
      _
    // Predicated region
    $region22: #{tpu_custom_call.1} parent=1 // pred_check
      _
    $region23: #{tpu_custom_call.1} parent=1 // pred_check_branch
      %34 = sbr.rel (0) target = $region25
    $region24: #{tpu_custom_call.1} parent=1 // pred_region
      _
    $region25: #{tpu_custom_call.1} parent=1 // pred_fallthru
      _
    // Predicated region
    $region26: #{tpu_custom_call.1} parent=1 // pred_check
      _
    $region27: #{tpu_custom_call.1} parent=1 // pred_check_branch
      %36 = sbr.rel (0) target = $region29
    $region28: #{tpu_custom_call.1} parent=1 // pred_region
      _
    $region29: #{tpu_custom_call.1} parent=1 // pred_fallthru
      _
    // Predicated region
    $region30: #{tpu_custom_call.1} parent=1 // pred_check
      _
    $region31: #{tpu_custom_call.1} parent=1 // pred_check_branch
      %38 = sbr.rel (0) target = $region33
    $region32: #{tpu_custom_call.1} parent=1 // pred_region
      %39 = dma.done [#allocation3], 2048
    $region33: #{tpu_custom_call.1} parent=1 // pred_fallthru
      _
    %v41 = vld [vmem:[%s0] sm:$0xf]
    %v42 = vld [vmem:[%s1] sm:$0xff]
    %v43 = vld [vmem:[%s1 + $0x8] sm:$0x33]
    %v44 = vld [vmem:[%s2] sm:$0x3]
    %v46 = vlaneseq
    %v47 = vshrl.u32 %v46, 7
    %v48 = vsub.s32 0, %v47
    %v49 = vrot.slane %v44, %v48
    %v50 = vlaneseq
    %v51 = vshrl.u32 %v50, 7
    %v52 = vsub.s32 1, %v51
    %v53 = vrot.slane %v44, %v52
    %v58 = vunpack.c.l.b16 %v42
    %v59 = vunpack.c.h.b16 %v42
    %v60 = vunpack.c.l.b16 %v43
    %v61 = vunpack.c.h.b16 %v43
    %v62 = vpack.c.b16 %v60, %v58
    %v63 = vpack.c.b16 %v61, %v59
    %vm64 = vcmask 97280
    %v66 = vsel %vm64, %v41, 0
    %vm68 = vcmask 1045504
    %v70 = vsel %vm68, %v62, 0
    %v73 = vsel %vm68, %v63, 0
    %75 = vmatprep.subr.bf16.mxu0 0
    %76 = vmatpush1.bf16.msra.mxu0 0
    %77 = vmatprep.subr.bf16.mxu0 0
    %78 = vmatpush1.bf16.msra.mxu0 0
    %79 = vmatprep.subr.bf16.mxu0 0
    %80 = vmatpush1.bf16.msra.mxu0 0
    %81 = vmatprep.subr.bf16.mxu0 0
    %82 = vmatpush1.bf16.msra.mxu0 0
    %83 = vmatprep.subr.bf16.mxu0 0
    %84 = vmatpush1.bf16.msra.mxu0 0
    %85 = vmatprep.subr.bf16.mxu0 0
    %86 = vmatpush1.bf16.msra.mxu0 0
    %87 = vmatprep.subr.bf16.mxu0 0
    %88 = vmatpush1.bf16.msra.mxu0 0
    %89 = vmatprep.subr.bf16.mxu0 %v73
    %90 = vmatpush1.bf16.msra.mxu0 %v70
    %91 = vmatprep.subr.bf16.mxu0 0
    %92 = vmatpush2.bf16.msra.mxu0 0
    %93 = vmatprep.subr.bf16.mxu0 0
    %94 = vmatpush2.bf16.msra.mxu0 0
    %95 = vmatprep.subr.bf16.mxu0 0
    %96 = vmatpush2.bf16.msra.mxu0 0
    %97 = vmatprep.subr.bf16.mxu0 0
    %98 = vmatpush2.bf16.msra.mxu0 0
    %99 = vmatprep.subr.bf16.mxu0 0
    %100 = vmatpush2.bf16.msra.mxu0 0
    %101 = vmatprep.subr.bf16.mxu0 0
    %102 = vmatpush2.bf16.msra.mxu0 0
    %103 = vmatprep.subr.bf16.mxu0 0
    %104 = vmatpush2.bf16.msra.mxu0 0
    %105 = vmatprep.subr.bf16.mxu0 0
    %106 = vmatpush2.bf16.msra.mxu0 0
    %107 = vmatprep.mubr.bf16.mxu0 0
    %108 = vmatmul.mubr.bf16.gmra.mxu0 %v66
    %v109 = vpop.f32.mrf.mxu0
    %v110 = vadd.f32 %v49, %v109
    %v111 = vpop.f32.mrf.mxu0
    %v112 = vadd.f32 %v53, %v111
    %v113 = vpop.f32.mrf.mxu0
    %v114 = vpop.f32.mrf.mxu0
    %115 = vdwg.mxu0
    %v116 = vmax.f32 %v110, 0.0
    %v117 = vmax.f32 %v112, 0.0
    %v118 = vpack.c.bf16 %v116, %v116
    %v119 = vpack.c.bf16 %v117, %v117
    %v120 = vld [vmem:[#allocation2] sm:$0xf]
    %v121 = vld [vmem:[#allocation2 + $0x4] sm:$0xf]
    %v122 = vld [vmem:[#allocation2 + $0x8] sm:$0xf]
    %v123 = vld [vmem:[#allocation2 + $0xc] sm:$0xf]
    %v124 = vld [vmem:[#allocation2 + $0x10] sm:$0xf]
    %v125 = vld [vmem:[#allocation2 + $0x14] sm:$0xf]
    %v126 = vld [vmem:[#allocation2 + $0x18] sm:$0xf]
    %v127 = vld [vmem:[#allocation2 + $0x1c] sm:$0xf]
    %v128 = vld [vmem:[#allocation2 + $0x20] sm:$0xf]
    %v129 = vld [vmem:[#allocation2 + $0x24] sm:$0xf]
    %v130 = vld [vmem:[#allocation2 + $0x28] sm:$0xf]
    %v131 = vld [vmem:[#allocation2 + $0x2c] sm:$0xf]
    %v132 = vld [vmem:[#allocation2 + $0x30] sm:$0xf]
    %v133 = vld [vmem:[#allocation2 + $0x34] sm:$0xf]
    %v134 = vld [vmem:[#allocation2 + $0x38] sm:$0xf]
    %v135 = vld [vmem:[#allocation2 + $0x3c] sm:$0xf]
    %v136 = vld [vmem:[#allocation2 + $0x40] sm:$0xf]
    %v137 = vld [vmem:[#allocation2 + $0x44] sm:$0xf]
    %v138 = vld [vmem:[#allocation2 + $0x48] sm:$0xf]
    %v139 = vld [vmem:[#allocation2 + $0x4c] sm:$0xf]
    %v140 = vld [vmem:[#allocation2 + $0x50] sm:$0xf]
    %v141 = vld [vmem:[#allocation2 + $0x54] sm:$0xf]
    %v142 = vld [vmem:[#allocation2 + $0x58] sm:$0xf]
    %v143 = vld [vmem:[#allocation2 + $0x5c] sm:$0xf]
    %v144 = vld [vmem:[#allocation2 + $0x60] sm:$0xf]
    %v145 = vld [vmem:[#allocation2 + $0x64] sm:$0xf]
    %v146 = vld [vmem:[#allocation2 + $0x68] sm:$0xf]
    %v147 = vld [vmem:[#allocation2 + $0x6c] sm:$0xf]
    %v148 = vld [vmem:[#allocation2 + $0x70] sm:$0xf]
    %v149 = vld [vmem:[#allocation2 + $0x74] sm:$0xf]
    %v150 = vld [vmem:[#allocation2 + $0x78] sm:$0xf]
    %v151 = vld [vmem:[#allocation2 + $0x7c] sm:$0xf]
    %v152 = vld [vmem:[%s4] sm:$0x1]
    %v154 = vlaneseq
    %v155 = vshrl.u32 %v154, 7
    %v156 = vsub.s32 0, %v155
    %v157 = vrot.slane %v152, %v156
    %v191 = vunpack.c.l.b16 %v120
    %v192 = vunpack.c.l.b16 %v121
    %v193 = vunpack.c.l.b16 %v122
    %v194 = vunpack.c.l.b16 %v123
    %v195 = vunpack.c.l.b16 %v124
    %v196 = vunpack.c.l.b16 %v125
    %v197 = vunpack.c.l.b16 %v126
    %v198 = vunpack.c.l.b16 %v127
    %v199 = vunpack.c.l.b16 %v128
    %v200 = vunpack.c.l.b16 %v129
    %v201 = vunpack.c.l.b16 %v130
    %v202 = vunpack.c.l.b16 %v131
    %v203 = vunpack.c.l.b16 %v132
    %v204 = vunpack.c.l.b16 %v133
    %v205 = vunpack.c.l.b16 %v134
    %v206 = vunpack.c.l.b16 %v135
    %v207 = vunpack.c.l.b16 %v136
    %v208 = vunpack.c.l.b16 %v137
    %v209 = vunpack.c.l.b16 %v138
    %v210 = vunpack.c.l.b16 %v139
    %v211 = vunpack.c.l.b16 %v140
    %v212 = vunpack.c.l.b16 %v141
    %v213 = vunpack.c.l.b16 %v142
    %v214 = vunpack.c.l.b16 %v143
    %v215 = vunpack.c.l.b16 %v144
    %v216 = vunpack.c.l.b16 %v145
    %v217 = vunpack.c.l.b16 %v146
    %v218 = vunpack.c.l.b16 %v147
    %v219 = vunpack.c.l.b16 %v148
    %v220 = vunpack.c.l.b16 %v149
    %v221 = vunpack.c.l.b16 %v150
    %v222 = vunpack.c.l.b16 %v151
    %v223 = vpack.c.b16 %v192, %v191
    %v224 = vpack.c.b16 %v194, %v193
    %v225 = vpack.c.b16 %v196, %v195
    %v226 = vpack.c.b16 %v198, %v197
    %v227 = vpack.c.b16 %v200, %v199
    %v228 = vpack.c.b16 %v202, %v201
    %v229 = vpack.c.b16 %v204, %v203
    %v230 = vpack.c.b16 %v206, %v205
    %v231 = vpack.c.b16 %v208, %v207
    %v232 = vpack.c.b16 %v210, %v209
    %v233 = vpack.c.b16 %v212, %v211
    %v234 = vpack.c.b16 %v214, %v213
    %v235 = vpack.c.b16 %v216, %v215
    %v236 = vpack.c.b16 %v218, %v217
    %v237 = vpack.c.b16 %v220, %v219
    %v238 = vpack.c.b16 %v222, %v221
    %255 = vmatprep.subr.bf16.mxu0 0
    %256 = vmatpush1.bf16.msra.mxu0 %v230
    %257 = vmatprep.subr.bf16.mxu0 0
    %258 = vmatpush1.bf16.msra.mxu0 %v229
    %259 = vmatprep.subr.bf16.mxu0 0
    %260 = vmatpush1.bf16.msra.mxu0 %v228
    %261 = vmatprep.subr.bf16.mxu0 0
    %262 = vmatpush1.bf16.msra.mxu0 %v227
    %263 = vmatprep.subr.bf16.mxu0 0
    %264 = vmatpush1.bf16.msra.mxu0 %v226
    %265 = vmatprep.subr.bf16.mxu0 0
    %266 = vmatpush1.bf16.msra.mxu0 %v225
    %267 = vmatprep.subr.bf16.mxu0 0
    %268 = vmatpush1.bf16.msra.mxu0 %v224
    %269 = vmatprep.subr.bf16.mxu0 0
    %270 = vmatpush1.bf16.msra.mxu0 %v223
    %271 = vmatprep.subr.bf16.mxu0 0
    %272 = vmatpush2.bf16.msra.mxu0 %v238
    %273 = vmatprep.subr.bf16.mxu0 0
    %274 = vmatpush2.bf16.msra.mxu0 %v237
    %275 = vmatprep.subr.bf16.mxu0 0
    %276 = vmatpush2.bf16.msra.mxu0 %v236
    %277 = vmatprep.subr.bf16.mxu0 0
    %278 = vmatpush2.bf16.msra.mxu0 %v235
    %279 = vmatprep.subr.bf16.mxu0 0
    %280 = vmatpush2.bf16.msra.mxu0 %v234
    %281 = vmatprep.subr.bf16.mxu0 0
    %282 = vmatpush2.bf16.msra.mxu0 %v233
    %283 = vmatprep.subr.bf16.mxu0 0
    %284 = vmatpush2.bf16.msra.mxu0 %v232
    %285 = vmatprep.subr.bf16.mxu0 0
    %286 = vmatpush2.bf16.msra.mxu0 %v231
    %287 = vmatprep.mubr.bf16.mxu0 %v119
    %288 = vmatmul.mubr.bf16.gmra.mxu0 %v118
    %v289 = vpop.f32.mrf.mxu0
    %v290 = vadd.f32 %v157, %v289
    %v291 = vpop.f32.mrf.mxu0
    %v292 = vpop.f32.mrf.mxu0
    %v293 = vpop.f32.mrf.mxu0
    %294 = vdwg.mxu0
    %v295 = vmax.f32 %v290, 0.0
    %v296 = vpack.c.bf16 %v295, %v295
    %v297 = vld [vmem:[%s5] sm:$0xf]
    %v298 = vld [vmem:[%s5 + $0x4] sm:$0xf]
    %v299 = vld [vmem:[%s5 + $0x8] sm:$0xf]
    %v300 = vld [vmem:[%s5 + $0xc] sm:$0xf]
    %v301 = vld [vmem:[%s5 + $0x10] sm:$0xf]
    %v302 = vld [vmem:[%s5 + $0x14] sm:$0xf]
    %v303 = vld [vmem:[%s5 + $0x18] sm:$0xf]
    %v304 = vld [vmem:[%s5 + $0x1c] sm:$0xf]
    %v305 = vld [vmem:[%s5 + $0x20] sm:$0xf]
    %v306 = vld [vmem:[%s5 + $0x24] sm:$0xf]
    %v307 = vld [vmem:[%s5 + $0x28] sm:$0xf]
    %v308 = vld [vmem:[%s5 + $0x2c] sm:$0xf]
    %v309 = vld [vmem:[%s5 + $0x30] sm:$0xf]
    %v310 = vld [vmem:[%s5 + $0x34] sm:$0xf]
    %v311 = vld [vmem:[%s5 + $0x38] sm:$0xf]
    %v312 = vld [vmem:[%s5 + $0x3c] sm:$0xf]
    %v313 = vld [vmem:[%s6] sm:$0x1]
    %v315 = vlaneseq
    %v316 = vshrl.u32 %v315, 7
    %v317 = vsub.s32 0, %v316
    %v318 = vrot.slane %v313, %v317
    %v336 = vunpack.c.l.b16 %v297
    %v337 = vunpack.c.l.b16 %v298
    %v338 = vunpack.c.l.b16 %v299
    %v339 = vunpack.c.l.b16 %v300
    %v340 = vunpack.c.l.b16 %v301
    %v341 = vunpack.c.l.b16 %v302
    %v342 = vunpack.c.l.b16 %v303
    %v343 = vunpack.c.l.b16 %v304
    %v344 = vunpack.c.l.b16 %v305
    %v345 = vunpack.c.l.b16 %v306
    %v346 = vunpack.c.l.b16 %v307
    %v347 = vunpack.c.l.b16 %v308
    %v348 = vunpack.c.l.b16 %v309
    %v349 = vunpack.c.l.b16 %v310
    %v350 = vunpack.c.l.b16 %v311
    %v351 = vunpack.c.l.b16 %v312
    %v352 = vpack.c.b16 %v337, %v336
    %v353 = vpack.c.b16 %v339, %v338
    %v354 = vpack.c.b16 %v341, %v340
    %v355 = vpack.c.b16 %v343, %v342
    %v356 = vpack.c.b16 %v345, %v344
    %v357 = vpack.c.b16 %v347, %v346
    %v358 = vpack.c.b16 %v349, %v348
    %v359 = vpack.c.b16 %v351, %v350
    %368 = vmatprep.subr.bf16.mxu0 0
    %369 = vmatpush1.bf16.msra.mxu0 %v359
    %370 = vmatprep.subr.bf16.mxu0 0
    %371 = vmatpush1.bf16.msra.mxu0 %v358
    %372 = vmatprep.subr.bf16.mxu0 0
    %373 = vmatpush1.bf16.msra.mxu0 %v357
    %374 = vmatprep.subr.bf16.mxu0 0
    %375 = vmatpush1.bf16.msra.mxu0 %v356
    %376 = vmatprep.subr.bf16.mxu0 0
    %377 = vmatpush1.bf16.msra.mxu0 %v355
    %378 = vmatprep.subr.bf16.mxu0 0
    %379 = vmatpush1.bf16.msra.mxu0 %v354
    %380 = vmatprep.subr.bf16.mxu0 0
    %381 = vmatpush1.bf16.msra.mxu0 %v353
    %382 = vmatprep.subr.bf16.mxu0 0
    %383 = vmatpush1.bf16.msra.mxu0 %v352
    %384 = vmatprep.subr.bf16.mxu0 0
    %385 = vmatpush2.bf16.msra.mxu0 0
    %386 = vmatprep.subr.bf16.mxu0 0
    %387 = vmatpush2.bf16.msra.mxu0 0
    %388 = vmatprep.subr.bf16.mxu0 0
    %389 = vmatpush2.bf16.msra.mxu0 0
    %390 = vmatprep.subr.bf16.mxu0 0
    %391 = vmatpush2.bf16.msra.mxu0 0
    %392 = vmatprep.subr.bf16.mxu0 0
    %393 = vmatpush2.bf16.msra.mxu0 0
    %394 = vmatprep.subr.bf16.mxu0 0
    %395 = vmatpush2.bf16.msra.mxu0 0
    %396 = vmatprep.subr.bf16.mxu0 0
    %397 = vmatpush2.bf16.msra.mxu0 0
    %398 = vmatprep.subr.bf16.mxu0 0
    %399 = vmatpush2.bf16.msra.mxu0 0
    %400 = vmatprep.mubr.bf16.mxu0 0
    %401 = vmatmul.mubr.bf16.gmra.mxu0 %v296
    %v402 = vpop.f32.mrf.mxu0
    %v403 = vadd.f32 %v318, %v402
    %v404 = vpop.f32.mrf.mxu0
    %v405 = vpop.f32.mrf.mxu0
    %v406 = vpop.f32.mrf.mxu0
    %407 = vdwg.mxu0
    %vm408 = vcmask 15360
    %409 = vst.msk [vmem:[%s7] sm:$0xff] %vm408, %v403
    // Predicated region
    $region34: #{tpu_custom_call.1} parent=1 // pred_check
      _
    $region35: #{tpu_custom_call.1} parent=1 // pred_check_branch
      %411 = sbr.rel (0) target = $region37
    $region36: #{tpu_custom_call.1} parent=1 // pred_region
      _
    $region37: #{tpu_custom_call.1} parent=1 // pred_fallthru
      _
    // Predicated region
    $region38: #{tpu_custom_call.1} parent=1 // pred_check
      _
    $region39: #{tpu_custom_call.1} parent=1 // pred_check_branch
      %413 = sbr.rel (0) target = $region41
    $region40: #{tpu_custom_call.1} parent=1 // pred_region
      _
    $region41: #{tpu_custom_call.1} parent=1 // pred_fallthru
      _
    %414 = vsyncpa [#allocation3], 1

</llo_original>
